<compile_context>
chip_gen: v7x
topology: tpu7x:2x2x1
jax: 0.10.0
libtpu: 0.0.40
codegen_flags: <defaults>
</compile_context>

<pallas_src>
import math

import jax
import jax.numpy as jnp
from jax.experimental import pallas as pl
from jax.experimental.pallas import tpu as pltpu


_VMEM_BUDGET = 20 * 1024 * 1024   # target working-set bytes (fits every generation)
_VMEM_LIMIT = 32 * 1024 * 1024    # explicit scoped-VMEM limit (safe on v5e/v6e/v7x)


def _choose_spatial_tile(h, w, c_in, c_out, itemsize=4, budget=_VMEM_BUDGET):
    """Channel-aware spatial tile: multiple of W and of 128 (or full H*W).

    Prefers leaving >= 2 spatial tiles so v7x's two TensorCores both get grid
    steps, while keeping (double-buffered blocks + in-kernel temps) under budget.
    """
    s = h * w
    # Approx VMEM bytes per spatial lane of tile:
    #   x block (2 bufs) + out block (2 bufs) + shifted copies / fused operand / dot temp
    per_lane = itemsize * (2 * c_in + 8 * c_out + 6 * c_in + 4 * c_out)
    t_max = max(128, budget // max(per_lane, 1))
    step = (w * 128) // math.gcd(w, 128)          # multiple of both W and 128
    if s % step != 0 or s == step:
        return s                                   # single full-image tile (row aligned)
    best = None
    t = step
    upper = min(t_max, s // 2)                     # keep >= 2 tiles for v7x
    while t <= upper:
        if s % t == 0:
            best = t
        t += step
    if best is None:
        best = step if (s // step) >= 2 else s
    return best


def _make_deconv_kernel(w_img, tile_s):
    """Kernel closure over static image width and spatial tile size."""

    def kernel(x_ref, halo_ref, w_ref, b_ref, o_ref):
        # x_ref    : (Cin, T)        flattened rows of the input image, T % W == 0
        # halo_ref : (Cin, W)        first row of the NEXT tile (zeros at image bottom)
        # w_ref    : (4*Cout, 4*Cin) phase-decomposed weights
        # b_ref    : (4*Cout, 1)
        # o_ref    : (4*Cout, T)     4 output phases
        xa = x_ref[...]                                           # x[m, p]
        xh = halo_ref[...]

        # Down-shift by one image row (W lanes); halo row handles the tile boundary.
        if tile_s > w_img:
            xdn = jnp.concatenate([xa[:, w_img:], xh], axis=1)    # x[m+1, p]
        else:  # single-row tile: the down-shift is entirely the halo row
            xdn = xh
        x2 = jnp.concatenate([xa, xdn], axis=0)                   # (2*Cin, T)

        # Right-shift by one lane inside each image row; (1, T) column mask.
        xr_raw = jnp.concatenate([x2[:, 1:], jnp.zeros_like(x2[:, :1])], axis=1)
        lane = jax.lax.broadcasted_iota(jnp.int32, (1, tile_s), 1)
        col_ok = (lane % w_img) < (w_img - 1)
        xr = jnp.where(col_ok, xr_raw, jnp.zeros_like(xr_raw))    # [x[m,p+1]; x[m+1,p+1]]

        # Single fused MXU GEMM over all 4 phases / 4 shifted operands.
        op = jnp.concatenate([x2, xr], axis=0)                    # (4*Cin, T)
        y = jnp.dot(w_ref[...], op, preferred_element_type=jnp.float32)
        y = y + b_ref[...].astype(jnp.float32)
        y = jnp.maximum(y, 0.0)                                   # fused ReLU
        o_ref[...] = y.astype(o_ref.dtype)

    return kernel


def deconv_layer_forward(x, weight, bias, out_shape,
                         stride=2, padding=1, output_padding=1):
    """Forward of DeConvLayer (NCHW input, PyTorch ConvTranspose2d weight layout)."""
    # TODO(synk): only the module's fixed config (k=3, s=2, p=1, op=1) is supported;
    # other configs need a different phase decomposition.
    assert stride == 2 and padding == 1 and output_padding == 1
    n, c_in, h, w_img = x.shape
    c_in_w, c_out, kh, kw = weight.shape
    assert c_in_w == c_in and kh == 3 and kw == 3

    s_total = h * w_img
    itemsize = jnp.dtype(x.dtype).itemsize
    tile_s = _choose_spatial_tile(h, w_img, c_in, c_out, itemsize)
    n_tiles = s_total // tile_s
    rows_per_tile = tile_s // w_img

    # ---- weight prep: (4*Cout, 4*Cin) phase block matrix -------------------
    wt = jnp.transpose(weight, (1, 0, 2, 3)).astype(x.dtype)     # (Cout, Cin, 3, 3)
    z = jnp.zeros((c_out, c_in), x.dtype)
    t_ = lambda i, j: wt[:, :, i, j]
    #   column blocks:   x(m,p)    x(m+1,p)   x(m,p+1)   x(m+1,p+1)
    wc = jnp.block([
        [t_(1, 1), z,        z,        z       ],                # out[2m  , 2p  ]
        [t_(1, 2), z,        t_(1, 0), z       ],                # out[2m  , 2p+1]
        [t_(2, 1), t_(0, 1), z,        z       ],                # out[2m+1, 2p  ]
        [t_(2, 2), t_(0, 2), t_(2, 0), t_(0, 0)],                # out[2m+1, 2p+1]
    ])
    bc = jnp.tile(bias.astype(x.dtype), 4).reshape(4 * c_out, 1)

    # ---- input prep: free flatten + tiny per-tile halo row (no HBM prestack) ----
    x_flat = x.reshape(n, c_in, s_total)
    nxt = (jnp.arange(n_tiles) + 1) * rows_per_tile              # first row of next tile
    valid = (nxt < h).astype(x.dtype)[None, :, None, None]       # zero past image bottom
    x_next = jnp.take(x, jnp.minimum(nxt, h - 1), axis=2)        # (n, Cin, nt, W)
    x_next = jnp.transpose(x_next, (0, 2, 1, 3)) * valid         # (n, nt, Cin, W)

    kernel = _make_deconv_kernel(w_img, tile_s)

    y = pl.pallas_call(
        kernel,
        out_shape=jax.ShapeDtypeStruct((n, 4 * c_out, s_total), x.dtype),
        grid_spec=pltpu.PrefetchScalarGridSpec(
            num_scalar_prefetch=0,
            grid=(n, n_tiles),
            in_specs=[
                pl.BlockSpec((None, c_in, tile_s), lambda b, t: (b, 0, t)),
                pl.BlockSpec((None, None, c_in, w_img), lambda b, t: (b, t, 0, 0)),
                pl.BlockSpec((4 * c_out, 4 * c_in), lambda b, t: (0, 0)),
                pl.BlockSpec((4 * c_out, 1), lambda b, t: (0, 0)),
            ],
            out_specs=pl.BlockSpec((None, 4 * c_out, tile_s),
                                   lambda b, t: (b, 0, t)),
        ),
        compiler_params=pltpu.CompilerParams(
            dimension_semantics=("parallel", "parallel"),
            vmem_limit_bytes=_VMEM_LIMIT),
    )(x_flat, x_next, wc, bc)

    # ---- interleave phases back to NCHW (static layout plumbing) -----------
    y = y.reshape(n, 2, 2, c_out, h, w_img)                      # (n, r, s, co, m, p)
    y = jnp.transpose(y, (0, 3, 4, 1, 5, 2))                     # (n, co, m, r, p, s)
    y = y.reshape(n, c_out, 2 * h, 2 * w_img)

    # ---- crop exactly like the PyTorch module (`&` of both conditions) -----
    oh, ow = y.shape[-2:]
    if (oh != out_shape[0]) and (ow != out_shape[1]):
        y = y[:, :, oh - out_shape[0]:, ow - out_shape[1]:]
    return y


def _deconv_layer_ref(x, weight, bias, out_shape,
                      stride=2, padding=1, output_padding=1):
    """Pure-JAX reference of DeConvLayer.forward (PyTorch semantics)."""
    k = weight.shape[-1]
    w_conv = jnp.transpose(jnp.flip(weight, axis=(-2, -1)), (1, 0, 2, 3))
    lo = k - 1 - padding
    hi = k - 1 - padding + output_padding
    y = jax.lax.conv_general_dilated(
        x, w_conv, window_strides=(1, 1),
        padding=((lo, hi), (lo, hi)),
        lhs_dilation=(stride, stride),
        dimension_numbers=("NCHW", "OIHW", "NCHW"),
        precision=jax.lax.Precision.HIGHEST)
    y = y + bias.reshape(1, -1, 1, 1)
    oh, ow = y.shape[-2:]
    if (oh != out_shape[0]) and (ow != out_shape[1]):
        y = y[:, :, oh - out_shape[0]:, ow - out_shape[1]:]
    return jnp.maximum(y, 0.0)


if __name__ == "__main__":
    key = jax.random.PRNGKey(0)
    kx, kw_, kb = jax.random.split(key, 3)

    batch, c_in, c_out, h, w = 2, 4, 8, 16, 16
    x = jax.random.normal(kx, (batch, c_in, h, w), dtype=jnp.float32)
    weight = 0.1 * jax.random.normal(kw_, (c_in, c_out, 3, 3), dtype=jnp.float32)
    bias = 0.1 * jax.random.normal(kb, (c_out,), dtype=jnp.float32)
    out_shape = (2 * h, 2 * w)

    out = deconv_layer_forward(x, weight, bias, out_shape)
    out = jax.block_until_ready(out)

    ref = _deconv_layer_ref(x, weight, bias, out_shape)
    assert out.shape == (batch, c_out, 2 * h, 2 * w)
    assert out.dtype == x.dtype
    err = float(jnp.max(jnp.abs(out - ref)))
    assert err < 2e-3, f"max abs err {err}"
    print("KERNEL_OK")
</pallas_src>

<mosaic_0001>
module attributes {stable_mosaic.version = 11 : i64} {
  func.func @kernel(%arg0: i32, %arg1: i32, %arg2: memref<1x4x128xf32, #tpu.memory_space<vmem>>, %arg3: memref<1x1x4x16xf32, #tpu.memory_space<vmem>>, %arg4: memref<32x16xf32, #tpu.memory_space<vmem>>, %arg5: memref<32x1xf32, #tpu.memory_space<vmem>>, %arg6: memref<1x32x128xf32, #tpu.memory_space<vmem>>) attributes {dimension_semantics = [#tpu.dimension_semantics<parallel>, #tpu.dimension_semantics<parallel>], iteration_bounds = array<i64: 2, 2>, scalar_prefetch = 0 : i64, scratch_operands = 0 : i64, tpu.core_type = #tpu.core_type<tc>, window_params = [{transform_indices = @transform_0, window_bounds = array<i64: 1, 4, 128>}, {transform_indices = @transform_1, window_bounds = array<i64: 1, 1, 4, 16>}, {pipeline_mode = #tpu.pipeline_mode<synchronous>, transform_indices = @transform_2, window_bounds = array<i64: 32, 16>}, {pipeline_mode = #tpu.pipeline_mode<synchronous>, transform_indices = @transform_3, window_bounds = array<i64: 32, 1>}, {transform_indices = @transform_4, window_bounds = array<i64: 1, 32, 128>}]} {
    %c0 = arith.constant 0 : index
    %c0_0 = arith.constant 0 : index
    %c0_1 = arith.constant 0 : index
    %0 = vector.load %arg2[%c0, %c0_0, %c0_1] : memref<1x4x128xf32, #tpu.memory_space<vmem>>, vector<1x4x128xf32>
    %1 = vector.shape_cast %0 : vector<1x4x128xf32> to vector<4x128xf32>
    %c0_2 = arith.constant 0 : index
    %c0_3 = arith.constant 0 : index
    %c0_4 = arith.constant 0 : index
    %c0_5 = arith.constant 0 : index
    %2 = vector.load %arg3[%c0_2, %c0_3, %c0_4, %c0_5] : memref<1x1x4x16xf32, #tpu.memory_space<vmem>>, vector<1x1x4x16xf32>
    %3 = vector.shape_cast %2 : vector<1x1x4x16xf32> to vector<4x16xf32>
    %4 = vector.extract_strided_slice %1 {offsets = [0, 16], sizes = [4, 112], strides = [1, 1]} : vector<4x128xf32> to vector<4x112xf32>
    %5 = tpu.concatenate %4, %3 in 1 : vector<4x112xf32>, vector<4x16xf32> -> vector<4x128xf32>
    %6 = tpu.concatenate %1, %5 in 0 : vector<4x128xf32>, vector<4x128xf32> -> vector<8x128xf32>
    %7 = vector.extract_strided_slice %6 {offsets = [0, 1], sizes = [8, 127], strides = [1, 1]} : vector<8x128xf32> to vector<8x127xf32>
    %cst = arith.constant 0.000000e+00 : f32
    %8 = vector.broadcast %cst : f32 to vector<8x1xf32>
    %9 = tpu.concatenate %7, %8 in 1 : vector<8x127xf32>, vector<8x1xf32> -> vector<8x128xf32>
    %10 = tpu.iota {dimensions = array<i32: 1>} : vector<1x128xi32>
    %c16_i32 = arith.constant 16 : i32
    %c0_i32 = arith.constant 0 : i32
    %11 = arith.cmpi eq, %c16_i32, %c0_i32 : i32
    %c1_i32 = arith.constant 1 : i32
    %12 = arith.select %11, %c1_i32, %c16_i32 : i32
    %13 = vector.broadcast %12 : i32 to vector<1x128xi32>
    %14 = arith.remsi %10, %13 : vector<1x128xi32>
    %c0_i32_6 = arith.constant 0 : i32
    %15 = vector.broadcast %c0_i32_6 : i32 to vector<1x128xi32>
    %16 = arith.cmpi ne, %14, %15 : vector<1x128xi32>
    %c0_i32_7 = arith.constant 0 : i32
    %17 = vector.broadcast %c0_i32_7 : i32 to vector<1x128xi32>
    %18 = arith.cmpi slt, %14, %17 : vector<1x128xi32>
    %c0_i32_8 = arith.constant 0 : i32
    %19 = arith.cmpi slt, %12, %c0_i32_8 : i32
    %20 = vector.broadcast %19 : i1 to vector<1x128xi1>
    %21 = vector.broadcast %20 : vector<1x128xi1> to vector<1x128xi1>
    %22 = arith.xori %18, %21 : vector<1x128xi1>
    %23 = arith.andi %22, %16 : vector<1x128xi1>
    %24 = vector.broadcast %12 : i32 to vector<1x128xi32>
    %25 = arith.addi %14, %24 : vector<1x128xi32>
    %26 = arith.select %23, %25, %14 : vector<1x128xi1>, vector<1x128xi32>
    %c15_i32 = arith.constant 15 : i32
    %27 = vector.broadcast %c15_i32 : i32 to vector<1x128xi32>
    %28 = arith.cmpi slt, %26, %27 : vector<1x128xi32>
    %cst_9 = arith.constant 0.000000e+00 : f32
    %29 = vector.broadcast %cst_9 : f32 to vector<8x128xf32>
    %30 = vector.shape_cast %28 : vector<1x128xi1> to vector<1x128xi1>
    %31 = vector.broadcast %30 : vector<1x128xi1> to vector<8x128xi1>
    %32 = arith.select %31, %9, %29 : vector<8x128xi1>, vector<8x128xf32>
    %33 = tpu.concatenate %6, %32 in 0 : vector<8x128xf32>, vector<8x128xf32> -> vector<16x128xf32>
    %c0_10 = arith.constant 0 : index
    %c0_11 = arith.constant 0 : index
    %34 = vector.load %arg4[%c0_10, %c0_11] : memref<32x16xf32, #tpu.memory_space<vmem>>, vector<32x16xf32>
    %cst_12 = arith.constant dense<0.000000e+00> : vector<32x128xf32>
    %35 = tpu.matmul %34, %33, %cst_12 {dimension_numbers = #tpu.dot_dimension_numbers<[1], [0], [0], [1], [0, 0, 1, 1], [], []>} : vector<32x16xf32>, vector<16x128xf32>, vector<32x128xf32> -> vector<32x128xf32>
    %c0_13 = arith.constant 0 : index
    %c0_14 = arith.constant 0 : index
    %36 = vector.load %arg5[%c0_13, %c0_14] : memref<32x1xf32, #tpu.memory_space<vmem>>, vector<32x1xf32>
    %37 = vector.broadcast %36 : vector<32x1xf32> to vector<32x128xf32>
    %38 = arith.addf %35, %37 : vector<32x128xf32>
    %cst_15 = arith.constant 0.000000e+00 : f32
    %39 = vector.broadcast %cst_15 : f32 to vector<32x128xf32>
    %40 = arith.maximumf %38, %39 : vector<32x128xf32>
    %c0_16 = arith.constant 0 : index
    %c0_17 = arith.constant 0 : index
    %c0_18 = arith.constant 0 : index
    %41 = vector.load %arg6[%c0_16, %c0_17, %c0_18] : memref<1x32x128xf32, #tpu.memory_space<vmem>>, vector<1x32x128xf32>
    %42 = vector.shape_cast %41 : vector<1x32x128xf32> to vector<32x128xf32>
    %43 = vector.shape_cast %40 : vector<32x128xf32> to vector<1x32x128xf32>
    tpu.vector_store %arg6[%c0_16, %c0_17, %c0_18], %43 {strides = array<i32>} : memref<1x32x128xf32, #tpu.memory_space<vmem>>, vector<1x32x128xf32>,
    return
  }
  func.func @transform_0(%arg0: i32, %arg1: i32) -> (i32, i32, i32) {
    %c0_i32 = arith.constant 0 : i32
    %c0_i32_0 = arith.constant 0 : i32
    return %arg0, %c0_i32, %arg1 : i32, i32, i32
  }
  func.func @transform_1(%arg0: i32, %arg1: i32) -> (i32, i32, i32, i32) {
    %c0_i32 = arith.constant 0 : i32
    %c0_i32_0 = arith.constant 0 : i32
    %c0_i32_1 = arith.constant 0 : i32
    return %arg0, %arg1, %c0_i32, %c0_i32_0 : i32, i32, i32, i32
  }
  func.func @transform_2(%arg0: i32, %arg1: i32) -> (i32, i32) {
    %c0_i32 = arith.constant 0 : i32
    %c0_i32_0 = arith.constant 0 : i32
    %c0_i32_1 = arith.constant 0 : i32
    return %c0_i32, %c0_i32_0 : i32, i32
  }
  func.func @transform_3(%arg0: i32, %arg1: i32) -> (i32, i32) {
    %c0_i32 = arith.constant 0 : i32
    %c0_i32_0 = arith.constant 0 : i32
    %c0_i32_1 = arith.constant 0 : i32
    return %c0_i32, %c0_i32_0 : i32, i32
  }
  func.func @transform_4(%arg0: i32, %arg1: i32) -> (i32, i32, i32) {
    %c0_i32 = arith.constant 0 : i32
    %c0_i32_0 = arith.constant 0 : i32
    return %arg0, %c0_i32, %arg1 : i32, i32, i32
  }
}

</mosaic_0001>

<llo_original>
// kernel: tpu_custom_call.1
$region0: #{tpu_custom_call.1}
  #allocation0 [shape = 'u32[]', space=smem, size = 0x4, offset = 0x4, fixed_abs, tag = 'smem constant byte address 0x4 - core index']
  #allocation1 [shape = 'u32[144,128]{1,0:T(1,128)}', space=vmem, size = 0x12000, scoped, tag = 'internal scratch']
  %s0 = inlined_call_operand.vmem [shape: f32[2,4,256], index: 0, kind: input, shape index: {}]
  %s1 = inlined_call_operand.vmem [shape: f32[2,2,4,16], index: 1, kind: input, shape index: {}]
  %s2 = inlined_call_operand.vmem [shape: f32[32,16], index: 2, kind: input, shape index: {}]
  %s3 = inlined_call_operand.vmem [shape: f32[32,1], index: 3, kind: input, shape index: {}]
  %s4 = inlined_call_operand.hbm [shape: f32[2,32,256], index: 4, kind: output, shape index: {}]
  %s5 = sld [smem:[#allocation0]]
  $region49: #{tpu_custom_call.1} parent=0
    _
  %s7 = ssub.s32 1, %s5
  %s8 = scalar_select 0, %s7, %s5
  $region1: #{tpu_custom_call.1} parent=0
    #allocation2 [shape = 'u8[32768]{0}', space=vmem, size = 0x8000, scoped, tag = 'output window, operand 0']
    #allocation3 [shape = 's32[2]{0}', space=sflag, size = 0x8, scoped, tag = 'scoped memory for tpu_custom_call.1']
    %9 = vsyncpa [#allocation3], 0
    %s10 = scalar_lea.sflag [#allocation3], 1
    %11 = vsyncpa %s10, 0
    loop: start=0, step=1, limit=6
    $region2: #{tpu_custom_call.1} parent=1 // loop_pre_header
      _
    $region3: #{tpu_custom_call.1} parent=1 // loop_header
      %s13 = sphi 0, %s17
      %p14 = scmp.ge.s32.totalorder %s13, 6
      %s20 = sphi 0, %s32
      %s21 = sphi 0, %s28
      %s22 = sphi 0, %s20
      %s23 = sphi 0, %s21
      %s24 = sphi 0, %s22
      %s25 = sphi 0, %s23
      %s37 = sphi 0, %s39
      %s40 = sphi 0, %s37
      %s41 = sphi 0, %s40
      %s57 = sphi 0, %s41
      %s65 = sphi 0, %s67
      %s68 = sphi 0, %s65
      %s69 = sphi 0, %s68
      %s85 = sphi 0, %s69
      %s89 = sphi 0, %s89
      %s91 = sphi 0, %s89
      %s92 = sphi 0, %s91
      %s106 = sphi 0, %s92
      %s110 = sphi 0, %s110
      %s112 = sphi 0, %s110
      %s113 = sphi 0, %s112
      %s127 = sphi 0, %s113
      %s135 = sphi 0, %s137
      %s138 = sphi 0, %s135
      %s139 = sphi 0, %s138
      %s155 = sphi 0, %s139
    $region4: #{tpu_custom_call.1} parent=1 // loop_header_branch
      %16 = sbr.rel (%p14) target = $region8
    $region5: #{tpu_custom_call.1} parent=1 // loop_body
      %s18 = ssub.s32 %s13, 1
      %s19 = ssub.s32 %s13, 2
      %s26 = sadd.s32 1, %s21
      %p27 = scmp.ge.s32.totalorder %s26, 2
      %s28 = scalar_select %p27, 0, %s26
      %s29 = sadd.s32 1, %s20
      %s30 = scalar_select %p27, %s29, %s20
      %p31 = scmp.ge.s32.totalorder %s30, 2
      %s32 = scalar_select %p31, 0, %s30
      %s33 = ssub.s32 %s20, %s32
      %s34 = ssub.s32 %s21, %s28
      %s35 = sor.u32 %s33, %s34
      %p36 = scmp.eq.s32.totalorder %s35, 0
      %s38 = sadd.s32 %s37, 1
      %s39 = scalar_select %p36, %s37, %s38
      %p42 = pneg %p36
      %p43 = scmp.eq.s32.totalorder %s13, 3
      %p44 = por %p42, %p43
      %p45 = scmp.ne.s32.totalorder %s37, %s40
      %p46 = scmp.eq.s32.totalorder %s13, 0
      %p47 = por %p45, %p46
      %p48 = scmp.ne.s32.totalorder %s37, %s40
      %p49 = scmp.eq.s32.totalorder %s18, 3
      %p50 = por %p48, %p49
      %p51 = scmp.ne.s32.totalorder %s40, %s41
      %p52 = scmp.eq.s32.totalorder %s18, 0
      %p53 = por %p51, %p52
      %p54 = scmp.ne.s32.totalorder %s40, %s41
      %p55 = scmp.eq.s32.totalorder %s19, 3
      %p56 = por %p54, %p55
      %p58 = scmp.ne.s32.totalorder %s41, %s57
      %p59 = scmp.eq.s32.totalorder %s19, 0
      %p60 = por %p58, %p59
      %s61 = ssub.s32 %s20, %s32
      %s62 = ssub.s32 %s21, %s28
      %s63 = sor.u32 %s61, %s62
      %p64 = scmp.eq.s32.totalorder %s63, 0
      %s66 = sadd.s32 %s65, 1
      %s67 = scalar_select %p64, %s65, %s66
      %p70 = pneg %p64
      %p71 = scmp.eq.s32.totalorder %s13, 3
      %p72 = por %p70, %p71
      %p73 = scmp.ne.s32.totalorder %s65, %s68
      %p74 = scmp.eq.s32.totalorder %s13, 0
      %p75 = por %p73, %p74
      %p76 = scmp.ne.s32.totalorder %s65, %s68
      %p77 = scmp.eq.s32.totalorder %s18, 3
      %p78 = por %p76, %p77
      %p79 = scmp.ne.s32.totalorder %s68, %s69
      %p80 = scmp.eq.s32.totalorder %s18, 0
      %p81 = por %p79, %p80
      %p82 = scmp.ne.s32.totalorder %s68, %s69
      %p83 = scmp.eq.s32.totalorder %s19, 3
      %p84 = por %p82, %p83
      %p86 = scmp.ne.s32.totalorder %s69, %s85
      %p87 = scmp.eq.s32.totalorder %s19, 0
      %p88 = por %p86, %p87
      %s90 = sadd.s32 %s89, 1
      %p93 = scmp.eq.s32.totalorder %s13, 3
      %p94 = scmp.ne.s32.totalorder %s89, %s91
      %p95 = scmp.eq.s32.totalorder %s13, 0
      %p96 = por %p94, %p95
      %p97 = scmp.ne.s32.totalorder %s89, %s91
      %p98 = scmp.eq.s32.totalorder %s18, 3
      %p99 = por %p97, %p98
      %p100 = scmp.ne.s32.totalorder %s91, %s92
      %p101 = scmp.eq.s32.totalorder %s18, 0
      %p102 = por %p100, %p101
      %p103 = scmp.ne.s32.totalorder %s91, %s92
      %p104 = scmp.eq.s32.totalorder %s19, 3
      %p105 = por %p103, %p104
      %p107 = scmp.ne.s32.totalorder %s92, %s106
      %p108 = scmp.eq.s32.totalorder %s19, 0
      %p109 = por %p107, %p108
      %s111 = sadd.s32 %s110, 1
      %p114 = scmp.eq.s32.totalorder %s13, 3
      %p115 = scmp.ne.s32.totalorder %s110, %s112
      %p116 = scmp.eq.s32.totalorder %s13, 0
      %p117 = por %p115, %p116
      %p118 = scmp.ne.s32.totalorder %s110, %s112
      %p119 = scmp.eq.s32.totalorder %s18, 3
      %p120 = por %p118, %p119
      %p121 = scmp.ne.s32.totalorder %s112, %s113
      %p122 = scmp.eq.s32.totalorder %s18, 0
      %p123 = por %p121, %p122
      %p124 = scmp.ne.s32.totalorder %s112, %s113
      %p125 = scmp.eq.s32.totalorder %s19, 3
      %p126 = por %p124, %p125
      %p128 = scmp.ne.s32.totalorder %s113, %s127
      %p129 = scmp.eq.s32.totalorder %s19, 0
      %p130 = por %p128, %p129
      %s131 = ssub.s32 %s20, %s32
      %s132 = ssub.s32 %s21, %s28
      %s133 = sor.u32 %s131, %s132
      %p134 = scmp.eq.s32.totalorder %s133, 0
      %s136 = sadd.s32 %s135, 1
      %s137 = scalar_select %p134, %s135, %s136
      %p140 = pneg %p134
      %p141 = scmp.eq.s32.totalorder %s13, 3
      %p142 = por %p140, %p141
      %p143 = scmp.ne.s32.totalorder %s135, %s138
      %p144 = scmp.eq.s32.totalorder %s13, 0
      %p145 = por %p143, %p144
      %p146 = scmp.ne.s32.totalorder %s135, %s138
      %p147 = scmp.eq.s32.totalorder %s18, 3
      %p148 = por %p146, %p147
      %p149 = scmp.ne.s32.totalorder %s138, %s139
      %p150 = scmp.eq.s32.totalorder %s18, 0
      %p151 = por %p149, %p150
      %p152 = scmp.ne.s32.totalorder %s138, %s139
      %p153 = scmp.eq.s32.totalorder %s19, 3
      %p154 = por %p152, %p153
      %p156 = scmp.ne.s32.totalorder %s139, %s155
      %p157 = scmp.eq.s32.totalorder %s19, 0
      %p158 = por %p156, %p157
      %p159 = scmp.le.s32.totalorder 1, %s13
      %p160 = scmp.lt.s32.totalorder %s13, 5
      %p161 = pnand %p159, %p160
      %p162 = pneg %p161
      // Predicated region
      $region9: #{tpu_custom_call.1} parent=5 // pred_check
        _
      $region10: #{tpu_custom_call.1} parent=5 // pred_check_branch
        %164 = sbr.rel (%p161) target = $region12
      $region11: #{tpu_custom_call.1} parent=5 // pred_region
        %s165 = ssub.s32 %s13, 1
        // Predicated region
        $region13: #{tpu_custom_call.1} parent=11 // pred_check
          %p166 = pneg %p102
        $region14: #{tpu_custom_call.1} parent=11 // pred_check_branch
          %168 = sbr.rel (%p166) target = $region16
        $region15: #{tpu_custom_call.1} parent=11 // pred_region
          _
        $region16: #{tpu_custom_call.1} parent=11 // pred_fallthru
          _
        // Predicated region
        $region17: #{tpu_custom_call.1} parent=11 // pred_check
          %p169 = pneg %p123
        $region18: #{tpu_custom_call.1} parent=11 // pred_check_branch
          %171 = sbr.rel (%p169) target = $region20
        $region19: #{tpu_custom_call.1} parent=11 // pred_region
          _
        $region20: #{tpu_custom_call.1} parent=11 // pred_fallthru
          _
      $region12: #{tpu_custom_call.1} parent=5 // pred_fallthru
        _
      %p172 = scmp.lt.s32.totalorder %s13, 4
      // Predicated region
      $region21: #{tpu_custom_call.1} parent=5 // pred_check
        %p173 = pneg %p172
      $region22: #{tpu_custom_call.1} parent=5 // pred_check_branch
        %175 = sbr.rel (%p173) target = $region24
      $region23: #{tpu_custom_call.1} parent=5 // pred_region
        // Predicated region
        $region25: #{tpu_custom_call.1} parent=23 // pred_check
          %p176 = pneg %p47
        $region26: #{tpu_custom_call.1} parent=23 // pred_check_branch
          %178 = sbr.rel (%p176) target = $region28
        $region27: #{tpu_custom_call.1} parent=23 // pred_region
          %p179 = scmp.lt.s32.totalorder %s20, 1
          %s180 = scalar_select %p179, %s20, 1
          %p181 = scmp.lt.s32.totalorder %s21, 1
          %s182 = scalar_select %p181, %s21, 1
          %s183 = smul.addr %s180, 2
          %s184 = sadd.s32 %s182, %s183
          %s185 = smul.addr %s184, 4
          %s186 = scalar_lea.vmem %s0, %s185
        $region28: #{tpu_custom_call.1} parent=23 // pred_fallthru
          _
        // Predicated region
        $region29: #{tpu_custom_call.1} parent=23 // pred_check
          %p187 = pneg %p75
        $region30: #{tpu_custom_call.1} parent=23 // pred_check_branch
          %189 = sbr.rel (%p187) target = $region32
        $region31: #{tpu_custom_call.1} parent=23 // pred_region
          %p190 = scmp.lt.s32.totalorder %s20, 1
          %s191 = scalar_select %p190, %s20, 1
          %p192 = scmp.lt.s32.totalorder %s21, 1
          %s193 = scalar_select %p192, %s21, 1
          %s194 = smul.addr %s191, 2
          %s195 = sadd.s32 %s193, %s194
          %s196 = smul.addr %s195, 4
          %s197 = scalar_lea.vmem %s1, %s196
        $region32: #{tpu_custom_call.1} parent=23 // pred_fallthru
          _
      $region24: #{tpu_custom_call.1} parent=5 // pred_fallthru
        _
      %p198 = scmp.le.s32.totalorder 1, %s13
      %p199 = scmp.lt.s32.totalorder %s13, 5
      %p200 = pnand %p198, %p199
      %p201 = pneg %p200
      // Predicated region
      $region33: #{tpu_custom_call.1} parent=5 // pred_check
        _
      $region34: #{tpu_custom_call.1} parent=5 // pred_check_branch
        %203 = sbr.rel (%p200) target = $region36
      $region35: #{tpu_custom_call.1} parent=5 // pred_region
        %s204 = ssub.s32 %s13, 1
        %p205 = scmp.lt.s32.totalorder %s22, 1
        %s206 = scalar_select %p205, %s22, 1
        %p207 = scmp.lt.s32.totalorder %s23, 1
        %s208 = scalar_select %p207, %s23, 1
        %s209 = smul.addr %s206, 2
        %s210 = sadd.s32 %s208, %s209
        %s211 = smul.addr %s210, 4
        %s212 = scalar_lea.vmem %s0, %s211
        %p213 = pneg %p53
        %p214 = pneg %p50
        %p215 = scmp.lt.s32.totalorder %s22, 1
        %s216 = scalar_select %p215, %s22, 1
        %p217 = scmp.lt.s32.totalorder %s23, 1
        %s218 = scalar_select %p217, %s23, 1
        %s219 = smul.addr %s216, 2
        %s220 = sadd.s32 %s218, %s219
        %s221 = smul.addr %s220, 4
        %s222 = scalar_lea.vmem %s1, %s221
        %p223 = pneg %p81
        %p224 = pneg %p78
        %p225 = pneg %p102
        %p226 = pneg %p99
        %p227 = pneg %p123
        %p228 = pneg %p120
        %p229 = pneg %p151
        %p230 = pneg %p148
        %s231 = sand.u32 %s138, 1
        %s232 = scalar_lea.sflag [#allocation3], %s231
        %s233 = sand.u32 %s138, 1
        %s234 = smul.addr %s233, 32
        %s235 = scalar_lea.vmem [#allocation2], %s234
        %p236 = scmp.lt.s32.totalorder %s22, 1
        %s237 = scalar_select %p236, %s22, 1
        %p238 = scmp.lt.s32.totalorder %s23, 1
        %s239 = scalar_select %p238, %s23, 1
        %s240 = smul.addr %s237, 2
        %s241 = sadd.s32 %s239, %s240
        %s242 = smul.addr %s241, 4
        %s243 = scalar_lea.vmem %s0, %s242
        %p244 = scmp.lt.s32.totalorder %s22, 1
        %s245 = scalar_select %p244, %s22, 1
        %p246 = scmp.lt.s32.totalorder %s23, 1
        %s247 = scalar_select %p246, %s23, 1
        %s248 = smul.addr %s245, 2
        %s249 = sadd.s32 %s247, %s248
        %s250 = smul.addr %s249, 4
        %s251 = scalar_lea.vmem %s1, %s250
        %v252 = vld [vmem:[%s243] sm:$0xf]
        %v253 = vld [vmem:[%s251] sm:$0xf]
        %255 = vrot.lane.b32.xlu0 %v252, 112
        %v256 = vpop.permute.xlu0 %255
        %259 = vrot.lane.b32.xlu0 %v253, 112
        %v260 = vpop.permute.xlu0 %259
        %vm262 = vcmask 916480
        %v263 = vsel %vm262, %v256, %v260
        %v265 = vrot.slane %v263, 4
        %vm267 = vcmask 1043456
        %v268 = vsel %vm267, %v252, %v265
        %270 = vrot.lane.b32.xlu0 %v268, 127
        %v271 = vpop.permute.xlu0 %270
        %vm273 = vcmask 1039360
        %v274 = vsel %vm273, %v271, 0.0
        %v275 = vlaneseq
        %v276 = vand.u32 %v275, 127
        %vm277 = vcmp.lt.s32.totalorder %v276, 0
        %v278 = vsub.s32 0, %v276
        %v279 = vsel %vm277, %v278, %v276
        %v280 = vshrl.u32 %v279, 4
        %v281 = vand.u32 %v279, 15
        %v282 = vsub.s32 0, %v281
        %v283 = vsel %vm277, %v282, %v281
        %vm284 = vcmp.ne.s32.totalorder %v283, 0
        %vm285 = vcmp.lt.s32.totalorder %v283, 0
        %vm286 = vmand %vm285, %vm284
        %v287 = vadd.s32 %v283, 16
        %v288 = vsel %vm286, %v287, %v283
        %vm289 = vcmp.lt.s32.totalorder %v288, 15
        %v290 = vsel %vm289, 1, 0
        %vm291 = vcmp.eq.s32.totalorder %v290, 1
        %v292 = vsel %vm291, %v274, 0.0
        %v293 = vld [vmem:[%s2] sm:$0xff]
        %v294 = vld [vmem:[%s2 + $0x8] sm:$0xff]
        %v295 = vld [vmem:[%s2 + $0x10] sm:$0xff]
        %v296 = vld [vmem:[%s2 + $0x18] sm:$0xff]
        %v297 = vld [vmem:[%s3] sm:$0xff]
        %v298 = vld [vmem:[%s3 + $0x8] sm:$0xff]
        %v299 = vld [vmem:[%s3 + $0x10] sm:$0xff]
        %v300 = vld [vmem:[%s3 + $0x18] sm:$0xff]
        %302 = vset.pattern.permute.xlu0 0
        %303 = vperm.xlu0 %302, %v297
        %v304 = vpop.permute.xlu0 %303
        %307 = vset.pattern.permute.xlu0 0
        %308 = vperm.xlu0 %307, %v298
        %v309 = vpop.permute.xlu0 %308
        %312 = vset.pattern.permute.xlu0 0
        %313 = vperm.xlu0 %312, %v299
        %v314 = vpop.permute.xlu0 %313
        %317 = vset.pattern.permute.xlu0 0
        %318 = vperm.xlu0 %317, %v300
        %v319 = vpop.permute.xlu0 %318
        %vm321 = vcmask 130048
        %v323 = vsel %vm321, %v293, 0
        %v326 = vsel %vm321, %v294, 0
        %v329 = vsel %vm321, %v295, 0
        %v332 = vsel %vm321, %v296, 0
        %334 = vmatprep.subr.mxu0 0.0
        %335 = vmatpush1.msra.mxu0 %v268
        %336 = vmatprep.subr.mxu0 0.0
        %337 = vmatpush1.msra.mxu0 %v292
        %338 = vmatprep.subr.mxu0 0.0
        %339 = vmatpush1.msra.mxu0 0.0
        %340 = vmatprep.subr.mxu0 0.0
        %341 = vmatpush1.msra.mxu0 0.0
        %342 = vmatprep.subr.mxu0 0.0
        %343 = vmatpush1.msra.mxu0 0.0
        %344 = vmatprep.subr.mxu0 0.0
        %345 = vmatpush1.msra.mxu0 0.0
        %346 = vmatprep.subr.mxu0 0.0
        %347 = vmatpush1.msra.mxu0 0.0
        %348 = vmatprep.subr.mxu0 0.0
        %349 = vmatpush1.msra.mxu0 0.0
        %350 = vmatprep.subr.mxu0 0.0
        %351 = vmatpush1.msra.mxu0 0.0
        %352 = vmatprep.subr.mxu0 0.0
        %353 = vmatpush1.msra.mxu0 0.0
        %354 = vmatprep.subr.mxu0 0.0
        %355 = vmatpush1.msra.mxu0 0.0
        %356 = vmatprep.subr.mxu0 0.0
        %357 = vmatpush1.msra.mxu0 0.0
        %358 = vmatprep.subr.mxu0 0.0
        %359 = vmatpush1.msra.mxu0 0.0
        %360 = vmatprep.subr.mxu0 0.0
        %361 = vmatpush1.msra.mxu0 0.0
        %362 = vmatprep.subr.mxu0 0.0
        %363 = vmatpush1.msra.mxu0 0.0
        %364 = vmatprep.subr.mxu0 0.0
        %365 = vmatpush1.msra.mxu0 0.0
        %366 = vmatprep.subr.mxu0 0.0
        %367 = vmatpush1.msra.mxu0 0.0
        %368 = vmatprep.subr.mxu0 0.0
        %369 = vmatpush1.msra.mxu0 0.0
        %370 = vmatprep.subr.mxu0 0.0
        %371 = vmatpush1.msra.mxu0 0.0
        %372 = vmatprep.subr.mxu0 0.0
        %373 = vmatpush1.msra.mxu0 0.0
        %374 = vmatprep.subr.mxu0 0.0
        %375 = vmatpush1.msra.mxu0 0.0
        %376 = vmatprep.subr.mxu0 0.0
        %377 = vmatpush1.msra.mxu0 0.0
        %378 = vmatprep.subr.mxu0 0.0
        %379 = vmatpush1.msra.mxu0 0.0
        %380 = vmatprep.subr.mxu0 0.0
        %381 = vmatpush1.msra.mxu0 0.0
        %382 = vmatprep.subr.mxu0 0.0
        %383 = vmatpush1.msra.mxu0 0.0
        %384 = vmatprep.subr.mxu0 0.0
        %385 = vmatpush1.msra.mxu0 0.0
        %386 = vmatprep.subr.mxu0 0.0
        %387 = vmatpush1.msra.mxu0 0.0
        %388 = vmatprep.subr.mxu0 0.0
        %389 = vmatpush1.msra.mxu0 0.0
        %390 = vmatprep.subr.mxu0 0.0
        %391 = vmatpush1.msra.mxu0 0.0
        %392 = vmatprep.subr.mxu0 0.0
        %393 = vmatpush1.msra.mxu0 0.0
        %394 = vmatprep.subr.mxu0 0.0
        %395 = vmatpush1.msra.mxu0 0.0
        %396 = vmatprep.subr.mxu0 0.0
        %397 = vmatpush1.msra.mxu0 0.0
        %398 = vmatprep.mubr.f32.mxu0 0.0
        %399 = vmatmul.mubr.f32.gmra.mrb[0].mxu0 %v323
        %v400 = vpop.f32.mrb[0].mxu0
        %v401 = vadd.f32 %v304, %v400
        %v402 = vpop.f32.mrb[0].mxu0
        %403 = vmatprep.mubr.f32.mxu0 0.0
        %404 = vmatmul.mubr.f32.gmra.mrb[0].mxu0 %v326
        %v405 = vpop.f32.mrb[0].mxu0
        %v406 = vadd.f32 %v309, %v405
        %v407 = vpop.f32.mrb[0].mxu0
        %408 = vmatprep.mubr.f32.mxu0 0.0
        %409 = vmatmul.mubr.f32.gmra.mrb[0].mxu0 %v329
        %v410 = vpop.f32.mrb[0].mxu0
        %v411 = vadd.f32 %v314, %v410
        %v412 = vpop.f32.mrb[0].mxu0
        %413 = vmatprep.mubr.f32.mxu0 0.0
        %414 = vmatmul.mubr.f32.gmra.mrb[0].mxu0 %v332
        %v415 = vpop.f32.mrb[0].mxu0
        %v416 = vadd.f32 %v319, %v415
        %v417 = vpop.f32.mrb[0].mxu0
        %418 = vdwg.mxu0
        %v419 = vmax.f32 %v401, 0.0
        %v420 = vmax.f32 %v406, 0.0
        %v421 = vmax.f32 %v411, 0.0
        %v422 = vmax.f32 %v416, 0.0
        %423 = vst [vmem:[%s235] sm:$0xff] %v419
        %424 = vst [vmem:[%s235 + $0x8] sm:$0xff] %v420
        %425 = vst [vmem:[%s235 + $0x10] sm:$0xff] %v421
        %426 = vst [vmem:[%s235 + $0x18] sm:$0xff] %v422
        %s427 = sand.u32 %s138, 1
        %s428 = scalar_lea.sflag [#allocation3], %s427
        %s429 = sand.u32 %s138, 1
        %s430 = smul.addr %s429, 32
        %s431 = scalar_lea.vmem [#allocation2], %s430
        // Predicated region
        $region37: #{tpu_custom_call.1} parent=35 // pred_check
          %p432 = pneg %p148
        $region38: #{tpu_custom_call.1} parent=35 // pred_check_branch
          %434 = sbr.rel (%p432) target = $region40
        $region39: #{tpu_custom_call.1} parent=35 // pred_region
          %s436 = ssub.s32 512, 512
          %437 = vsyncadd %s428, %s436
          %s438 = smul.addr %s22, 8
          %s439 = sadd.s32 %s23, %s438
          %s440 = smul.addr %s439, 128
          %s441 = scalar_lea.hbm %s4, %s440
          %s442 = sshll.u32 %s431, 4
          %s443 = int_to_ptr.vmem [resolvable:$true] %s442
          %448 = dma.vmem_to_hbm [thread:$0]  %s443, 512, %s441, %s428, 128, 256, 8
        $region40: #{tpu_custom_call.1} parent=35 // pred_fallthru
          _
      $region36: #{tpu_custom_call.1} parent=5 // pred_fallthru
        _
      %p449 = scmp.le.s32.totalorder 2, %s13
      // Predicated region
      $region41: #{tpu_custom_call.1} parent=5 // pred_check
        %p450 = pneg %p449
      $region42: #{tpu_custom_call.1} parent=5 // pred_check_branch
        %452 = sbr.rel (%p450) target = $region44
      $region43: #{tpu_custom_call.1} parent=5 // pred_region
        %s453 = ssub.s32 %s13, 2
        // Predicated region
        $region45: #{tpu_custom_call.1} parent=43 // pred_check
          %p454 = pneg %p154
        $region46: #{tpu_custom_call.1} parent=43 // pred_check_branch
          %456 = sbr.rel (%p454) target = $region48
        $region47: #{tpu_custom_call.1} parent=43 // pred_region
          %s457 = sand.u32 %s139, 1
          %s458 = scalar_lea.sflag [#allocation3], %s457
          %s459 = sand.u32 %s139, 1
          %s460 = smul.addr %s459, 32
          %s461 = scalar_lea.vmem [#allocation2], %s460
          %462 = dma.done %s458, 512
        $region48: #{tpu_custom_call.1} parent=43 // pred_fallthru
          _
      $region44: #{tpu_custom_call.1} parent=5 // pred_fallthru
        _
    $region6: #{tpu_custom_call.1} parent=1 // loop_footer
      %s17 = sadd.s32 1, %s13
    $region7: #{tpu_custom_call.1} parent=1 // loop_footer_branch
      %12 = sbr.rel target = $region3
    $region8: #{tpu_custom_call.1} parent=1 // loop_exit
      _
    %463 = vsyncpa [#allocation3], 1
    %s464 = scalar_lea.sflag [#allocation3], 1
    %465 = vsyncpa %s464, 1

</llo_original>
